<compile_context>
chip_gen: v7x
topology: tpu7x:2x2x1
jax: 0.10.0
libtpu: 0.0.40
codegen_flags: <defaults>
</compile_context>

<pallas_src>
import math
import functools

import jax
import jax.numpy as jnp
from jax import lax
from jax.experimental import pallas as pl
from jax.experimental.pallas import tpu as pltpu


_INV_SQRT2 = 0.7071067811865476


def _round_up(x, m):
    return ((x + m - 1) // m) * m


def _vmem_capacity_bytes():
    """Per-core VMEM capacity (generation aware); conservative v7x fallback."""
    try:
        info = pltpu.get_tpu_info()
        cap = int(getattr(info, "vmem_capacity_bytes", 0))
        if cap > 0:
            return cap
    except Exception:
        pass
    return 64 * 1024 * 1024


def _num_tensorcores():
    """TensorCores per chip (v7x: 2).  Fallback 1 -> no forced row split."""
    try:
        d = jax.devices()[0]
        n = getattr(d, "num_cores", None)
        if n:
            return int(n)
        kind = str(getattr(d, "device_kind", "")).lower()
        if "v7" in kind or "7x" in kind:
            return 2
    except Exception:
        pass
    return 1


def _vmem_need_bytes(tm, th, f_in_p, f_out_p, x_bytes, out_bytes, w_buffers):
    bf16, f32 = 2, 4
    return (
        2 * tm * f_in_p * x_bytes                 # x row tiles (double-buffered)
        + 2 * tm * f_out_p * out_bytes            # out row tiles (double-buffered)
        + w_buffers * f_in_p * th * bf16          # W1 hidden chunk(s)
        + w_buffers * max(th, 128) * f32          # b1 chunk(s)
        + w_buffers * th * f_out_p * bf16         # W2 hidden chunk(s)
        + f_out_p * f32                           # b2 (resident)
        + tm * f_out_p * f32                      # fc2 accumulator scratch
        + 3 * tm * th * f32                       # fc1 / GELU intermediates headroom
    )


# -----------------------------------------------------------------------------
# kernel
# -----------------------------------------------------------------------------
def _mlp_kernel(x_ref, w1_ref, b1_ref, w2_ref, b2_ref, o_ref, acc_ref):
    h_idx = pl.program_id(1)
    n_h = pl.num_programs(1)

    # fc1 chunk on the MXU: cast x to bf16 in-kernel (VPU cast hides under MXU)
    x_bf16 = x_ref[...].astype(jnp.bfloat16)
    h = jnp.dot(x_bf16, w1_ref[...], preferred_element_type=jnp.float32)
    h = h + b1_ref[...]                           # (1, th) broadcasts over rows

    # exact (erf) GELU in f32 — matches torch.nn.GELU default
    half_h = 0.5 * h
    g = half_h + half_h * lax.erf(h * _INV_SQRT2)

    # partial fc2 contribution of this hidden chunk
    partial = jnp.dot(g.astype(jnp.bfloat16), w2_ref[...],
                      preferred_element_type=jnp.float32)

    @pl.when(h_idx == 0)
    def _():
        acc_ref[...] = partial

    @pl.when(h_idx > 0)
    def _():
        acc_ref[...] += partial

    @pl.when(h_idx == n_h - 1)
    def _():
        o_ref[...] = (acc_ref[...] + b2_ref[...]).astype(o_ref.dtype)


# -----------------------------------------------------------------------------
# pallas_call wrapper (jit-compiled; tm / th / dtype / vmem limit are static)
# -----------------------------------------------------------------------------
@functools.partial(jax.jit,
                   static_argnames=("tm", "th", "out_dtype", "vmem_limit"))
def _mlp_pallas_call(x_p, w1_p, b1_p, w2_p, b2_p, *, tm, th, out_dtype, vmem_limit):
    Mp, F_in_p = x_p.shape
    H_p = w1_p.shape[1]
    F_out_p = w2_p.shape[1]
    n_row = Mp // tm
    n_h = H_p // th

    # whole hidden dim in one chunk -> weights stay resident, single-buffer them;
    # otherwise default double-buffering streams weight chunks behind the MXU.
    w_mode = pl.Buffered(1) if n_h == 1 else None

    def _spec(shape, index_map, mode=None):
        if mode is None:
            return pl.BlockSpec(shape, index_map)
        return pl.BlockSpec(shape, index_map, pipeline_mode=mode)

    grid_spec = pltpu.PrefetchScalarGridSpec(
        num_scalar_prefetch=0,
        grid=(n_row, n_h),
        in_specs=[
            # x row tile: double-buffered, re-used across all hidden chunks
            _spec((tm, F_in_p), lambda i, h: (i, 0)),
            # W1 / b1 hidden chunks
            _spec((F_in_p, th), lambda i, h: (0, h), w_mode),
            _spec((1, th), lambda i, h: (0, h), w_mode),
            # W2 hidden chunk
            _spec((th, F_out_p), lambda i, h: (h, 0), w_mode),
            # b2 is grid-invariant -> single-buffered
            _spec((1, F_out_p), lambda i, h: (0, 0), pl.Buffered(1)),
        ],
        out_specs=pl.BlockSpec((tm, F_out_p), lambda i, h: (i, 0)),
        scratch_shapes=[pltpu.VMEM((tm, F_out_p), jnp.float32)],
    )

    return pl.pallas_call(
        _mlp_kernel,
        out_shape=jax.ShapeDtypeStruct((Mp, F_out_p), out_dtype),
        grid_spec=grid_spec,
        compiler_params=pltpu.CompilerParams(
            dimension_semantics=("parallel", "arbitrary"),
            vmem_limit_bytes=vmem_limit,
        ),
    )(x_p, w1_p, b1_p, w2_p, b2_p)


# -----------------------------------------------------------------------------
# public API
# -----------------------------------------------------------------------------
def prepare_mlp_params(w1, b1, w2, b2):
    """One-time weight prep: pad feature dims to 128 lanes, cast weights to bf16.

    Call once at init (NOT per forward) so each forward reads the weights from
    HBM exactly once.  Accepts biases shaped (fan_out,) or (1, fan_out).
    Weights are stored (fan_in, fan_out) so the kernel computes x @ w.
    """
    F_in, H = w1.shape
    H2, F_out = w2.shape
    assert H == H2, "w1/w2 hidden dims mismatch"
    b1 = jnp.asarray(b1).reshape(1, -1)
    b2 = jnp.asarray(b2).reshape(1, -1)

    F_in_p = _round_up(F_in, 128)
    H_p = _round_up(H, 128)
    F_out_p = _round_up(F_out, 128)

    w1_p = jnp.pad(w1, ((0, F_in_p - F_in), (0, H_p - H))).astype(jnp.bfloat16)
    b1_p = jnp.pad(b1, ((0, 0), (0, H_p - H))).astype(jnp.float32)
    w2_p = jnp.pad(w2, ((0, H_p - H), (0, F_out_p - F_out))).astype(jnp.bfloat16)
    b2_p = jnp.pad(b2, ((0, 0), (0, F_out_p - F_out))).astype(jnp.float32)

    return {"w1": w1_p, "b1": b1_p, "w2": w2_p, "b2": b2_p,
            "shapes": (F_in, H, F_out)}


def mlp_pallas(x, params, *, tm=None):
    """x: (..., F_in).  `params` from prepare_mlp_params (padded/bf16, reused)."""
    F_in, H, F_out = params["shapes"]
    w1_p, b1_p, w2_p, b2_p = params["w1"], params["b1"], params["w2"], params["b2"]
    F_in_p, H_p = w1_p.shape
    F_out_p = w2_p.shape[1]

    lead = x.shape[:-1]
    assert x.shape[-1] == F_in
    M = int(math.prod(lead)) if lead else 1
    x2d = x.reshape(M, F_in)

    out_dtype = jnp.dtype(x.dtype)            # keep the module's activation dtype
    x_bytes = jnp.dtype(x.dtype).itemsize
    out_bytes = out_dtype.itemsize

    cap = _vmem_capacity_bytes()
    budget = int(cap * 0.75)                  # headroom for compiler scratch / sems
    cores = _num_tensorcores()

    # --- row tile (tm) -------------------------------------------------------
    if tm is None:
        tm = 512 if cores == 1 else 256       # big row tiles on 1-TC chips (v5e/v6e)
    tm = max(16, min(_round_up(tm, 16), _round_up(M, 16)))

    # v7x megacore: force >=2 balanced row programs only when >=2 TensorCores exist
    if cores >= 2 and M > 16 and pl.cdiv(M, tm) < 2:
        tm = max(16, _round_up(pl.cdiv(M, 2), 16))

    # --- hidden tile (th): largest 128-multiple divisor of H_p that fits ------
    q = H_p // 128
    th_candidates = sorted({128 * d for d in range(1, q + 1) if q % d == 0},
                           reverse=True)

    def need(tm_, th_):
        w_buf = 1 if th_ == H_p else 2
        return _vmem_need_bytes(tm_, th_, F_in_p, F_out_p, x_bytes, out_bytes, w_buf)

    def largest_th_fitting(tm_):
        for th_c in th_candidates:
            if need(tm_, th_c) <= budget:
                return th_c
        return None

    # prefer streaming the hidden dim before shrinking tm (128-row floor holds
    # unless even (tm=128, th=128) does not fit)
    th = largest_th_fitting(tm)
    while th is None and tm > 16:
        tm = max(16, _round_up(tm // 2, 16))
        th = largest_th_fitting(tm)
    if th is None:
        tm, th = 16, 128                      # extreme fallback; rely on vmem margin

    # v7x: prefer an even number of row programs so both TensorCores get equal work
    if cores >= 2:
        n_row = pl.cdiv(M, tm)
        if n_row > 1 and n_row % 2 == 1:
            tm_even = max(16, _round_up(pl.cdiv(M, n_row + 1), 16))
            if pl.cdiv(M, tm_even) % 2 == 0:
                tm = tm_even                  # smaller tm -> still fits the budget

    # --- pad x only when needed (skip copy in the aligned case) ---------------
    Mp = _round_up(M, tm)
    if Mp == M and F_in_p == F_in:
        x_p = x2d
    else:
        x_p = jnp.pad(x2d, ((0, Mp - M), (0, F_in_p - F_in)))

    # --- vmem limit: actual need + ~30% margin, clamped to physical capacity --
    w_buf = 1 if th == H_p else 2
    need_bytes = _vmem_need_bytes(tm, th, F_in_p, F_out_p, x_bytes, out_bytes, w_buf)
    vmem_limit = int(min(max(int(need_bytes * 1.3), 16 * 1024 * 1024),
                         int(cap * 0.9)))

    out_p = _mlp_pallas_call(x_p, w1_p, b1_p, w2_p, b2_p,
                             tm=tm, th=th, out_dtype=out_dtype,
                             vmem_limit=vmem_limit)

    out2d = out_p if (Mp == M and F_out_p == F_out) else out_p[:M, :F_out]
    return out2d.reshape(*lead, F_out)


# -----------------------------------------------------------------------------
# reference / init / demo
# -----------------------------------------------------------------------------
def init_linear_params(key, fan_in, fan_out, dtype=jnp.float32):
    """PyTorch-style Linear init: U(-1/sqrt(fan_in), 1/sqrt(fan_in))."""
    kw, kb = jax.random.split(key)
    bound = 1.0 / math.sqrt(fan_in)
    w = jax.random.uniform(kw, (fan_in, fan_out), dtype, minval=-bound, maxval=bound)
    b = jax.random.uniform(kb, (1, fan_out), dtype, minval=-bound, maxval=bound)
    return w, b


def mlp_reference(x2d, w1, b1, w2, b2):
    """Exact-f32 reference matching torch: Linear -> GELU(erf) -> Linear."""
    h = x2d @ w1 + b1
    h = 0.5 * h * (1.0 + lax.erf(h * _INV_SQRT2))
    return h @ w2 + b2


# norm=None and dropout=0.0 (module defaults) are identity in this forward.
# TODO(synk): if dropout p>0 is ever needed, add pltpu.prng_seed/prng_random_bits
#             masking inside the kernel.

if __name__ == "__main__":
    batch, seq = 2, 8
    in_features, hidden_features, out_features = 32, 64, 16

    key = jax.random.PRNGKey(0)
    kx, k1, k2 = jax.random.split(key, 3)

    x = jax.random.normal(kx, (batch, seq, in_features), jnp.float32)
    w1, b1 = init_linear_params(k1, in_features, hidden_features)
    w2, b2 = init_linear_params(k2, hidden_features, out_features)

    params = prepare_mlp_params(w1, b1, w2, b2)   # one-time pad + bf16 cast
    out = mlp_pallas(x, params)
    jax.block_until_ready(out)

    ref = mlp_reference(x.reshape(-1, in_features), w1, b1, w2, b2)
    ref = ref.reshape(batch, seq, out_features)
    assert out.shape == (batch, seq, out_features)
    assert out.dtype == x.dtype
    assert jnp.allclose(out, ref, atol=5e-2, rtol=5e-2), "mismatch vs reference"

    print("KERNEL_OK")
</pallas_src>

<mosaic_0001>
module attributes {stable_mosaic.version = 11 : i64} {
  func.func @_mlp_kernel(%arg0: i32, %arg1: i32, %arg2: memref<16x128xf32, #tpu.memory_space<vmem>>, %arg3: memref<128x128xbf16, #tpu.memory_space<vmem>>, %arg4: memref<1x128xf32, #tpu.memory_space<vmem>>, %arg5: memref<128x128xbf16, #tpu.memory_space<vmem>>, %arg6: memref<1x128xf32, #tpu.memory_space<vmem>>, %arg7: memref<16x128xf32, #tpu.memory_space<vmem>>, %arg8: memref<16x128xf32, #tpu.memory_space<vmem>>) attributes {dimension_semantics = [#tpu.dimension_semantics<parallel>, #tpu.dimension_semantics<arbitrary>], iteration_bounds = array<i64: 1, 1>, scalar_prefetch = 0 : i64, scratch_operands = 1 : i64, tpu.core_type = #tpu.core_type<tc>, window_params = [{transform_indices = @transform_0, window_bounds = array<i64: 16, 128>}, {pipeline_mode = #tpu.pipeline_mode<synchronous>, transform_indices = @transform_1, window_bounds = array<i64: 128, 128>}, {pipeline_mode = #tpu.pipeline_mode<synchronous>, transform_indices = @transform_2, window_bounds = array<i64: 1, 128>}, {pipeline_mode = #tpu.pipeline_mode<synchronous>, transform_indices = @transform_3, window_bounds = array<i64: 128, 128>}, {pipeline_mode = #tpu.pipeline_mode<synchronous>, transform_indices = @transform_4, window_bounds = array<i64: 1, 128>}, {transform_indices = @transform_5, window_bounds = array<i64: 16, 128>}]} {
    %c0 = arith.constant 0 : index
    %c0_0 = arith.constant 0 : index
    %0 = vector.load %arg2[%c0, %c0_0] : memref<16x128xf32, #tpu.memory_space<vmem>>, vector<16x128xf32>
    %1 = arith.truncf %0 : vector<16x128xf32> to vector<16x128xbf16>
    %c0_1 = arith.constant 0 : index
    %c0_2 = arith.constant 0 : index
    %2 = vector.load %arg3[%c0_1, %c0_2] : memref<128x128xbf16, #tpu.memory_space<vmem>>, vector<128x128xbf16>
    %cst = arith.constant dense<0.000000e+00> : vector<16x128xf32>
    %3 = tpu.matmul %1, %2, %cst {dimension_numbers = #tpu.dot_dimension_numbers<[1], [0], [0], [1], [0, 0, 1, 1], [], []>} : vector<16x128xbf16>, vector<128x128xbf16>, vector<16x128xf32> -> vector<16x128xf32>
    %c0_3 = arith.constant 0 : index
    %c0_4 = arith.constant 0 : index
    %4 = vector.load %arg4[%c0_3, %c0_4] : memref<1x128xf32, #tpu.memory_space<vmem>>, vector<1x128xf32>
    %5 = vector.broadcast %4 : vector<1x128xf32> to vector<16x128xf32>
    %6 = arith.addf %3, %5 : vector<16x128xf32>
    %cst_5 = arith.constant 5.000000e-01 : f32
    %7 = vector.broadcast %cst_5 : f32 to vector<16x128xf32>
    %8 = arith.mulf %7, %6 : vector<16x128xf32>
    %cst_6 = arith.constant 0.707106769 : f32
    %9 = vector.broadcast %cst_6 : f32 to vector<16x128xf32>
    %10 = arith.mulf %6, %9 : vector<16x128xf32>
    %11 = math.erf %10 : vector<16x128xf32>
    %12 = arith.mulf %8, %11 : vector<16x128xf32>
    %13 = arith.addf %8, %12 : vector<16x128xf32>
    %14 = arith.truncf %13 : vector<16x128xf32> to vector<16x128xbf16>
    %c0_7 = arith.constant 0 : index
    %c0_8 = arith.constant 0 : index
    %15 = vector.load %arg5[%c0_7, %c0_8] : memref<128x128xbf16, #tpu.memory_space<vmem>>, vector<128x128xbf16>
    %cst_9 = arith.constant dense<0.000000e+00> : vector<16x128xf32>
    %16 = tpu.matmul %14, %15, %cst_9 {dimension_numbers = #tpu.dot_dimension_numbers<[1], [0], [0], [1], [0, 0, 1, 1], [], []>} : vector<16x128xbf16>, vector<128x128xbf16>, vector<16x128xf32> -> vector<16x128xf32>
    %c0_i32 = arith.constant 0 : i32
    %17 = arith.cmpi eq, %arg1, %c0_i32 : i32
    %18 = arith.extui %17 : i1 to i32
    %c0_i32_10 = arith.constant 0 : i32
    %19 = arith.cmpi ne, %18, %c0_i32_10 : i32
    scf.if %19 {
      %c0_15 = arith.constant 0 : index
      %c0_16 = arith.constant 0 : index
      %26 = vector.load %arg8[%c0_15, %c0_16] : memref<16x128xf32, #tpu.memory_space<vmem>>, vector<16x128xf32>
      tpu.vector_store %arg8[%c0_15, %c0_16], %16 {strides = array<i32>} : memref<16x128xf32, #tpu.memory_space<vmem>>, vector<16x128xf32>,
    } else {
    }
    %c0_i32_11 = arith.constant 0 : i32
    %20 = arith.cmpi sgt, %arg1, %c0_i32_11 : i32
    %21 = arith.extui %20 : i1 to i32
    %c0_i32_12 = arith.constant 0 : i32
    %22 = arith.cmpi ne, %21, %c0_i32_12 : i32
    scf.if %22 {
      %c0_15 = arith.constant 0 : index
      %c0_16 = arith.constant 0 : index
      %26 = vector.load %arg8[%c0_15, %c0_16] : memref<16x128xf32, #tpu.memory_space<vmem>>, vector<16x128xf32>
      %27 = arith.addf %26, %16 : vector<16x128xf32>
      %c0_17 = arith.constant 0 : index
      %c0_18 = arith.constant 0 : index
      %28 = vector.load %arg8[%c0_17, %c0_18] : memref<16x128xf32, #tpu.memory_space<vmem>>, vector<16x128xf32>
      tpu.vector_store %arg8[%c0_17, %c0_18], %27 {strides = array<i32>} : memref<16x128xf32, #tpu.memory_space<vmem>>, vector<16x128xf32>,
    } else {
    }
    %c0_i32_13 = arith.constant 0 : i32
    %23 = arith.cmpi eq, %arg1, %c0_i32_13 : i32
    %24 = arith.extui %23 : i1 to i32
    %c0_i32_14 = arith.constant 0 : i32
    %25 = arith.cmpi ne, %24, %c0_i32_14 : i32
    scf.if %25 {
      %c0_15 = arith.constant 0 : index
      %c0_16 = arith.constant 0 : index
      %26 = vector.load %arg8[%c0_15, %c0_16] : memref<16x128xf32, #tpu.memory_space<vmem>>, vector<16x128xf32>
      %c0_17 = arith.constant 0 : index
      %c0_18 = arith.constant 0 : index
      %27 = vector.load %arg6[%c0_17, %c0_18] : memref<1x128xf32, #tpu.memory_space<vmem>>, vector<1x128xf32>
      %28 = vector.broadcast %27 : vector<1x128xf32> to vector<16x128xf32>
      %29 = arith.addf %26, %28 : vector<16x128xf32>
      %c0_19 = arith.constant 0 : index
      %c0_20 = arith.constant 0 : index
      %30 = vector.load %arg7[%c0_19, %c0_20] : memref<16x128xf32, #tpu.memory_space<vmem>>, vector<16x128xf32>
      tpu.vector_store %arg7[%c0_19, %c0_20], %29 {strides = array<i32>} : memref<16x128xf32, #tpu.memory_space<vmem>>, vector<16x128xf32>,
    } else {
    }
    return
  }
  func.func @transform_0(%arg0: i32, %arg1: i32) -> (i32, i32) {
    %c0_i32 = arith.constant 0 : i32
    %c0_i32_0 = arith.constant 0 : i32
    return %arg0, %c0_i32 : i32, i32
  }
  func.func @transform_1(%arg0: i32, %arg1: i32) -> (i32, i32) {
    %c0_i32 = arith.constant 0 : i32
    %c0_i32_0 = arith.constant 0 : i32
    return %c0_i32, %arg1 : i32, i32
  }
  func.func @transform_2(%arg0: i32, %arg1: i32) -> (i32, i32) {
    %c0_i32 = arith.constant 0 : i32
    %c0_i32_0 = arith.constant 0 : i32
    return %c0_i32, %arg1 : i32, i32
  }
  func.func @transform_3(%arg0: i32, %arg1: i32) -> (i32, i32) {
    %c0_i32 = arith.constant 0 : i32
    %c0_i32_0 = arith.constant 0 : i32
    return %arg1, %c0_i32 : i32, i32
  }
  func.func @transform_4(%arg0: i32, %arg1: i32) -> (i32, i32) {
    %c0_i32 = arith.constant 0 : i32
    %c0_i32_0 = arith.constant 0 : i32
    %c0_i32_1 = arith.constant 0 : i32
    return %c0_i32, %c0_i32_0 : i32, i32
  }
  func.func @transform_5(%arg0: i32, %arg1: i32) -> (i32, i32) {
    %c0_i32 = arith.constant 0 : i32
    %c0_i32_0 = arith.constant 0 : i32
    return %arg0, %c0_i32 : i32, i32
  }
}

</mosaic_0001>

<llo_original>
// kernel: _mlp_pallas_call.1
$region0: #{_mlp_pallas_call.1}
  #allocation0 [shape = 'u32[]', space=smem, size = 0x4, offset = 0x4, fixed_abs, tag = 'smem constant byte address 0x4 - core index']
  #allocation1 [shape = 'u32[144,128]{1,0:T(1,128)}', space=vmem, size = 0x12000, scoped, tag = 'internal scratch']
  #allocation2 [shape = 'f32[16,128]{1,0:T(8,128)}', space=vmem, size = 0x2000, scoped, tag = 'scratch operand']
  %s0 = inlined_call_operand.hbm [shape: f32[16,128], index: 0, kind: input, shape index: {}]
  %s1 = inlined_call_operand.hbm [shape: bf16[128,128], index: 1, kind: input, shape index: {}]
  %s2 = inlined_call_operand.vmem [shape: f32[1,128], index: 2, kind: input, shape index: {}]
  %s3 = inlined_call_operand.hbm [shape: bf16[128,128], index: 3, kind: input, shape index: {}]
  %s4 = inlined_call_operand.vmem [shape: f32[1,128], index: 4, kind: input, shape index: {}]
  %s5 = inlined_call_operand.hbm [shape: f32[16,128], index: 5, kind: output, shape index: {}]
  %s6 = sld [smem:[#allocation0]]
  $region54: #{_mlp_pallas_call.1} parent=0
    _
  %s8 = ssub.s32 1, %s6
  %s9 = scalar_select 0, %s8, %s6
  $region1: #{_mlp_pallas_call.1} parent=0
    #allocation3 [shape = 'u8[8192]{0}', space=vmem, size = 0x2000, scoped, tag = 'input window, operand 0, single buffered']
    #allocation4 [shape = 's32[1]{0}', space=sflag, size = 0x4, scoped, tag = 'scoped memory for _mlp_pallas_call.1']
    #allocation5 [shape = 's32[1]{0}', space=sflag, size = 0x4, scoped, tag = 'scoped memory for _mlp_pallas_call.1']
    #allocation6 [shape = 'u8[32768]{0}', space=vmem, size = 0x8000, scoped, tag = 'input window, operand 1, single buffered']
    #allocation7 [shape = 's32[1]{0}', space=sflag, size = 0x4, scoped, tag = 'scoped memory for _mlp_pallas_call.1']
    #allocation8 [shape = 'u8[32768]{0}', space=vmem, size = 0x8000, scoped, tag = 'input window, operand 3, single buffered']
    #allocation9 [shape = 'u8[8192]{0}', space=vmem, size = 0x2000, scoped, tag = 'output window, operand 0, single buffered']
    %10 = vsyncpa [#allocation4], 0
    %11 = vsyncpa [#allocation7], 0
    %12 = vsyncpa [#allocation5], 0
    // Predicated region
    $region2: #{_mlp_pallas_call.1} parent=1 // pred_check
      _
    $region3: #{_mlp_pallas_call.1} parent=1 // pred_check_branch
      %14 = sbr.rel (0) target = $region5
    $region4: #{_mlp_pallas_call.1} parent=1 // pred_region
      %s16 = ssub.s32 256, 256
      %17 = vsyncadd [#allocation4], %s16
      %s18 = sshll.u32 [#allocation3], 4
      %s19 = int_to_ptr.vmem [resolvable:$true] %s18
      %24 = dma.hbm_to_vmem [thread:$0]  %s0, 256, %s19, [#allocation4], 128, 128, 8
    $region5: #{_mlp_pallas_call.1} parent=1 // pred_fallthru
      _
    // Predicated region
    $region6: #{_mlp_pallas_call.1} parent=1 // pred_check
      _
    $region7: #{_mlp_pallas_call.1} parent=1 // pred_check_branch
      %26 = sbr.rel (0) target = $region9
    $region8: #{_mlp_pallas_call.1} parent=1 // pred_region
      %s28 = ssub.s32 1024, 1024
      %29 = vsyncadd [#allocation7], %s28
      %s30 = sshll.u32 [#allocation6], 4
      %s31 = int_to_ptr.vmem [resolvable:$true] %s30
      %36 = dma.hbm_to_vmem [thread:$0]  %s1, 1024, %s31, [#allocation7], 64, 64, 4
    $region9: #{_mlp_pallas_call.1} parent=1 // pred_fallthru
      _
    // Predicated region
    $region10: #{_mlp_pallas_call.1} parent=1 // pred_check
      _
    $region11: #{_mlp_pallas_call.1} parent=1 // pred_check_branch
      %38 = sbr.rel (0) target = $region13
    $region12: #{_mlp_pallas_call.1} parent=1 // pred_region
      _
    $region13: #{_mlp_pallas_call.1} parent=1 // pred_fallthru
      _
    // Predicated region
    $region14: #{_mlp_pallas_call.1} parent=1 // pred_check
      _
    $region15: #{_mlp_pallas_call.1} parent=1 // pred_check_branch
      %40 = sbr.rel (0) target = $region17
    $region16: #{_mlp_pallas_call.1} parent=1 // pred_region
      %s42 = ssub.s32 1024, 1024
      %43 = vsyncadd [#allocation7], %s42
      %s44 = sshll.u32 [#allocation8], 4
      %s45 = int_to_ptr.vmem [resolvable:$true] %s44
      %50 = dma.hbm_to_vmem [thread:$0]  %s3, 1024, %s45, [#allocation7], 64, 64, 4
    $region17: #{_mlp_pallas_call.1} parent=1 // pred_fallthru
      _
    // Predicated region
    $region18: #{_mlp_pallas_call.1} parent=1 // pred_check
      _
    $region19: #{_mlp_pallas_call.1} parent=1 // pred_check_branch
      %52 = sbr.rel (0) target = $region21
    $region20: #{_mlp_pallas_call.1} parent=1 // pred_region
      _
    $region21: #{_mlp_pallas_call.1} parent=1 // pred_fallthru
      _
    // Predicated region
    $region22: #{_mlp_pallas_call.1} parent=1 // pred_check
      _
    $region23: #{_mlp_pallas_call.1} parent=1 // pred_check_branch
      %54 = sbr.rel (0) target = $region25
    $region24: #{_mlp_pallas_call.1} parent=1 // pred_region
      %55 = dma.done [#allocation4], 256
    $region25: #{_mlp_pallas_call.1} parent=1 // pred_fallthru
      _
    // Predicated region
    $region26: #{_mlp_pallas_call.1} parent=1 // pred_check
      _
    $region27: #{_mlp_pallas_call.1} parent=1 // pred_check_branch
      %57 = sbr.rel (0) target = $region29
    $region28: #{_mlp_pallas_call.1} parent=1 // pred_region
      %58 = dma.done [#allocation7], 1024
    $region29: #{_mlp_pallas_call.1} parent=1 // pred_fallthru
      _
    // Predicated region
    $region30: #{_mlp_pallas_call.1} parent=1 // pred_check
      _
    $region31: #{_mlp_pallas_call.1} parent=1 // pred_check_branch
      %60 = sbr.rel (0) target = $region33
    $region32: #{_mlp_pallas_call.1} parent=1 // pred_region
      %61 = dma.done [#allocation7], 1024
    $region33: #{_mlp_pallas_call.1} parent=1 // pred_fallthru
      _
    %v63 = vld [vmem:[#allocation3] sm:$0xff]
    %v64 = vld [vmem:[#allocation3 + $0x8] sm:$0xff]
    %v65 = vpack.c.bf16 %v64, %v63
    %v66 = vld [vmem:[#allocation6] sm:$0xf]
    %v67 = vld [vmem:[#allocation6 + $0x4] sm:$0xf]
    %v68 = vld [vmem:[#allocation6 + $0x8] sm:$0xf]
    %v69 = vld [vmem:[#allocation6 + $0xc] sm:$0xf]
    %v70 = vld [vmem:[#allocation6 + $0x10] sm:$0xf]
    %v71 = vld [vmem:[#allocation6 + $0x14] sm:$0xf]
    %v72 = vld [vmem:[#allocation6 + $0x18] sm:$0xf]
    %v73 = vld [vmem:[#allocation6 + $0x1c] sm:$0xf]
    %v74 = vld [vmem:[#allocation6 + $0x20] sm:$0xf]
    %v75 = vld [vmem:[#allocation6 + $0x24] sm:$0xf]
    %v76 = vld [vmem:[#allocation6 + $0x28] sm:$0xf]
    %v77 = vld [vmem:[#allocation6 + $0x2c] sm:$0xf]
    %v78 = vld [vmem:[#allocation6 + $0x30] sm:$0xf]
    %v79 = vld [vmem:[#allocation6 + $0x34] sm:$0xf]
    %v80 = vld [vmem:[#allocation6 + $0x38] sm:$0xf]
    %v81 = vld [vmem:[#allocation6 + $0x3c] sm:$0xf]
    %v82 = vld [vmem:[%s2] sm:$0x1]
    %v84 = vlaneseq
    %v85 = vshrl.u32 %v84, 7
    %v86 = vsub.s32 0, %v85
    %v87 = vrot.slane %v82, %v86
    %v105 = vunpack.c.l.b16 %v66
    %v106 = vunpack.c.l.b16 %v67
    %v107 = vunpack.c.l.b16 %v68
    %v108 = vunpack.c.l.b16 %v69
    %v109 = vunpack.c.l.b16 %v70
    %v110 = vunpack.c.l.b16 %v71
    %v111 = vunpack.c.l.b16 %v72
    %v112 = vunpack.c.l.b16 %v73
    %v113 = vunpack.c.l.b16 %v74
    %v114 = vunpack.c.l.b16 %v75
    %v115 = vunpack.c.l.b16 %v76
    %v116 = vunpack.c.l.b16 %v77
    %v117 = vunpack.c.l.b16 %v78
    %v118 = vunpack.c.l.b16 %v79
    %v119 = vunpack.c.l.b16 %v80
    %v120 = vunpack.c.l.b16 %v81
    %v121 = vpack.c.b16 %v106, %v105
    %v122 = vpack.c.b16 %v108, %v107
    %v123 = vpack.c.b16 %v110, %v109
    %v124 = vpack.c.b16 %v112, %v111
    %v125 = vpack.c.b16 %v114, %v113
    %v126 = vpack.c.b16 %v116, %v115
    %v127 = vpack.c.b16 %v118, %v117
    %v128 = vpack.c.b16 %v120, %v119
    %137 = vmatprep.subr.bf16.mxu0 0
    %138 = vmatpush1.bf16.msra.mxu0 %v121
    %139 = vmatprep.subr.bf16.mxu0 0
    %140 = vmatpush1.bf16.msra.mxu0 %v122
    %141 = vmatprep.subr.bf16.mxu0 0
    %142 = vmatpush1.bf16.msra.mxu0 %v123
    %143 = vmatprep.subr.bf16.mxu0 0
    %144 = vmatpush1.bf16.msra.mxu0 %v124
    %145 = vmatprep.subr.bf16.mxu0 0
    %146 = vmatpush1.bf16.msra.mxu0 %v125
    %147 = vmatprep.subr.bf16.mxu0 0
    %148 = vmatpush1.bf16.msra.mxu0 %v126
    %149 = vmatprep.subr.bf16.mxu0 0
    %150 = vmatpush1.bf16.msra.mxu0 %v127
    %151 = vmatprep.subr.bf16.mxu0 0
    %152 = vmatpush1.bf16.msra.mxu0 %v128
    %153 = vmatprep.subr.bf16.mxu0 0
    %154 = vmatpush1.bf16.msra.mxu0 0
    %155 = vmatprep.subr.bf16.mxu0 0
    %156 = vmatpush1.bf16.msra.mxu0 0
    %157 = vmatprep.subr.bf16.mxu0 0
    %158 = vmatpush1.bf16.msra.mxu0 0
    %159 = vmatprep.subr.bf16.mxu0 0
    %160 = vmatpush1.bf16.msra.mxu0 0
    %161 = vmatprep.subr.bf16.mxu0 0
    %162 = vmatpush1.bf16.msra.mxu0 0
    %163 = vmatprep.subr.bf16.mxu0 0
    %164 = vmatpush1.bf16.msra.mxu0 0
    %165 = vmatprep.subr.bf16.mxu0 0
    %166 = vmatpush1.bf16.msra.mxu0 0
    %167 = vmatprep.subr.bf16.mxu0 0
    %168 = vmatpush1.bf16.msra.mxu0 0
    %169 = vmatprep.mubr.bf16.mxu0 0
    %170 = vmatmul.mubr.bf16.gmra.mrb[0].mxu0 %v65
    %v171 = vpop.f32.mrb[0].mxu0
    %v172 = vadd.f32 %v87, %v171
    %v173 = vpop.f32.mrb[0].mxu0
    %v174 = vpop.f32.mrb[0].mxu0
    %v175 = vadd.f32 %v87, %v174
    %v176 = vpop.f32.mrb[0].mxu0
    %177 = vdwg.mxu0
    %v178 = vmul.f32 %v172, 0.5
    %v179 = vmul.f32 %v175, 0.5
    %v180 = vmul.f32 %v172, 0.70710677
    %v181 = vmul.f32 %v175, 0.70710677
    %v182 = verf.f32.pop %v180
    %v183 = verf.f32.pop %v181
    %v184 = vmul.f32 %v178, %v182
    %v185 = vmul.f32 %v179, %v183
    %v186 = vadd.f32 %v178, %v184
    %v187 = vadd.f32 %v179, %v185
    %v188 = vpack.c.bf16 %v187, %v186
    %v189 = vld [vmem:[#allocation8] sm:$0xf]
    %v190 = vld [vmem:[#allocation8 + $0x4] sm:$0xf]
    %v191 = vld [vmem:[#allocation8 + $0x8] sm:$0xf]
    %v192 = vld [vmem:[#allocation8 + $0xc] sm:$0xf]
    %v193 = vld [vmem:[#allocation8 + $0x10] sm:$0xf]
    %v194 = vld [vmem:[#allocation8 + $0x14] sm:$0xf]
    %v195 = vld [vmem:[#allocation8 + $0x18] sm:$0xf]
    %v196 = vld [vmem:[#allocation8 + $0x1c] sm:$0xf]
    %v197 = vld [vmem:[#allocation8 + $0x20] sm:$0xf]
    %v198 = vld [vmem:[#allocation8 + $0x24] sm:$0xf]
    %v199 = vld [vmem:[#allocation8 + $0x28] sm:$0xf]
    %v200 = vld [vmem:[#allocation8 + $0x2c] sm:$0xf]
    %v201 = vld [vmem:[#allocation8 + $0x30] sm:$0xf]
    %v202 = vld [vmem:[#allocation8 + $0x34] sm:$0xf]
    %v203 = vld [vmem:[#allocation8 + $0x38] sm:$0xf]
    %v204 = vld [vmem:[#allocation8 + $0x3c] sm:$0xf]
    %v221 = vunpack.c.l.b16 %v189
    %v222 = vunpack.c.l.b16 %v190
    %v223 = vunpack.c.l.b16 %v191
    %v224 = vunpack.c.l.b16 %v192
    %v225 = vunpack.c.l.b16 %v193
    %v226 = vunpack.c.l.b16 %v194
    %v227 = vunpack.c.l.b16 %v195
    %v228 = vunpack.c.l.b16 %v196
    %v229 = vunpack.c.l.b16 %v197
    %v230 = vunpack.c.l.b16 %v198
    %v231 = vunpack.c.l.b16 %v199
    %v232 = vunpack.c.l.b16 %v200
    %v233 = vunpack.c.l.b16 %v201
    %v234 = vunpack.c.l.b16 %v202
    %v235 = vunpack.c.l.b16 %v203
    %v236 = vunpack.c.l.b16 %v204
    %v237 = vpack.c.b16 %v222, %v221
    %v238 = vpack.c.b16 %v224, %v223
    %v239 = vpack.c.b16 %v226, %v225
    %v240 = vpack.c.b16 %v228, %v227
    %v241 = vpack.c.b16 %v230, %v229
    %v242 = vpack.c.b16 %v232, %v231
    %v243 = vpack.c.b16 %v234, %v233
    %v244 = vpack.c.b16 %v236, %v235
    %253 = vmatprep.subr.bf16.mxu0 0
    %254 = vmatpush1.bf16.msra.mxu0 %v237
    %255 = vmatprep.subr.bf16.mxu0 0
    %256 = vmatpush1.bf16.msra.mxu0 %v238
    %257 = vmatprep.subr.bf16.mxu0 0
    %258 = vmatpush1.bf16.msra.mxu0 %v239
    %259 = vmatprep.subr.bf16.mxu0 0
    %260 = vmatpush1.bf16.msra.mxu0 %v240
    %261 = vmatprep.subr.bf16.mxu0 0
    %262 = vmatpush1.bf16.msra.mxu0 %v241
    %263 = vmatprep.subr.bf16.mxu0 0
    %264 = vmatpush1.bf16.msra.mxu0 %v242
    %265 = vmatprep.subr.bf16.mxu0 0
    %266 = vmatpush1.bf16.msra.mxu0 %v243
    %267 = vmatprep.subr.bf16.mxu0 0
    %268 = vmatpush1.bf16.msra.mxu0 %v244
    %269 = vmatprep.subr.bf16.mxu0 0
    %270 = vmatpush1.bf16.msra.mxu0 0
    %271 = vmatprep.subr.bf16.mxu0 0
    %272 = vmatpush1.bf16.msra.mxu0 0
    %273 = vmatprep.subr.bf16.mxu0 0
    %274 = vmatpush1.bf16.msra.mxu0 0
    %275 = vmatprep.subr.bf16.mxu0 0
    %276 = vmatpush1.bf16.msra.mxu0 0
    %277 = vmatprep.subr.bf16.mxu0 0
    %278 = vmatpush1.bf16.msra.mxu0 0
    %279 = vmatprep.subr.bf16.mxu0 0
    %280 = vmatpush1.bf16.msra.mxu0 0
    %281 = vmatprep.subr.bf16.mxu0 0
    %282 = vmatpush1.bf16.msra.mxu0 0
    %283 = vmatprep.subr.bf16.mxu0 0
    %284 = vmatpush1.bf16.msra.mxu0 0
    %285 = vmatprep.mubr.bf16.mxu0 0
    %286 = vmatmul.mubr.bf16.gmra.mrb[0].mxu0 %v188
    %v287 = vpop.f32.mrb[0].mxu0
    %v288 = vadd.f32 0.0, %v287
    %v289 = vpop.f32.mrb[0].mxu0
    %v290 = vpop.f32.mrb[0].mxu0
    %v291 = vadd.f32 0.0, %v290
    %v292 = vpop.f32.mrb[0].mxu0
    %293 = vdwg.mxu0
    %p294 = scmp.eq.s32.totalorder 0, 0
    // Predicated region
    $region34: #{_mlp_pallas_call.1} parent=1 // pred_check
      %p295 = pneg %p294
    $region35: #{_mlp_pallas_call.1} parent=1 // pred_check_branch
      %297 = sbr.rel (%p295) target = $region37
    $region36: #{_mlp_pallas_call.1} parent=1 // pred_region
      %298 = vst [vmem:[#allocation2] sm:$0xff] %v288
      %299 = vst [vmem:[#allocation2 + $0x8] sm:$0xff] %v291
    $region37: #{_mlp_pallas_call.1} parent=1 // pred_fallthru
      _
    %p300 = scmp.gt.s32.totalorder 0, 0
    // Predicated region
    $region38: #{_mlp_pallas_call.1} parent=1 // pred_check
      %p301 = pneg %p300
    $region39: #{_mlp_pallas_call.1} parent=1 // pred_check_branch
      %303 = sbr.rel (%p301) target = $region41
    $region40: #{_mlp_pallas_call.1} parent=1 // pred_region
      %v304 = vld [vmem:[#allocation2] sm:$0xff]
      %v305 = vld [vmem:[#allocation2 + $0x8] sm:$0xff]
      %v306 = vadd.f32 %v304, %v288
      %v307 = vadd.f32 %v305, %v291
      %308 = vst [vmem:[#allocation2] sm:$0xff] %v306
      %309 = vst [vmem:[#allocation2 + $0x8] sm:$0xff] %v307
    $region41: #{_mlp_pallas_call.1} parent=1 // pred_fallthru
      _
    // Predicated region
    $region42: #{_mlp_pallas_call.1} parent=1 // pred_check
      %p310 = pneg %p294
    $region43: #{_mlp_pallas_call.1} parent=1 // pred_check_branch
      %312 = sbr.rel (%p310) target = $region45
    $region44: #{_mlp_pallas_call.1} parent=1 // pred_region
      %v313 = vld [vmem:[#allocation2] sm:$0xff]
      %v314 = vld [vmem:[#allocation2 + $0x8] sm:$0xff]
      %v315 = vld [vmem:[%s4] sm:$0x1]
      %v317 = vlaneseq
      %v318 = vshrl.u32 %v317, 7
      %v319 = vsub.s32 0, %v318
      %v320 = vrot.slane %v315, %v319
      %v322 = vadd.f32 %v313, %v320
      %v323 = vadd.f32 %v314, %v320
      %324 = vst [vmem:[#allocation9] sm:$0xff] %v322
      %325 = vst [vmem:[#allocation9 + $0x8] sm:$0xff] %v323
    $region45: #{_mlp_pallas_call.1} parent=1 // pred_fallthru
      _
    // Predicated region
    $region46: #{_mlp_pallas_call.1} parent=1 // pred_check
      _
    $region47: #{_mlp_pallas_call.1} parent=1 // pred_check_branch
      %327 = sbr.rel (0) target = $region49
    $region48: #{_mlp_pallas_call.1} parent=1 // pred_region
      %s329 = ssub.s32 256, 256
      %330 = vsyncadd [#allocation5], %s329
      %s331 = sshll.u32 [#allocation9], 4
      %s332 = int_to_ptr.vmem [resolvable:$true] %s331
      %337 = dma.vmem_to_hbm [thread:$0]  %s332, 256, %s5, [#allocation5], 128, 128, 8
    $region49: #{_mlp_pallas_call.1} parent=1 // pred_fallthru
      _
    // Predicated region
    $region50: #{_mlp_pallas_call.1} parent=1 // pred_check
      _
    $region51: #{_mlp_pallas_call.1} parent=1 // pred_check_branch
      %339 = sbr.rel (0) target = $region53
    $region52: #{_mlp_pallas_call.1} parent=1 // pred_region
      %340 = dma.done [#allocation5], 256
    $region53: #{_mlp_pallas_call.1} parent=1 // pred_fallthru
      _
    %341 = vsyncpa [#allocation4], 1
    %342 = vsyncpa [#allocation7], 1
    %343 = vsyncpa [#allocation5], 1

</llo_original>
